<compile_context>
chip_gen: v7x
topology: tpu7x:2x2x1
jax: 0.10.0
libtpu: 0.0.40
codegen_flags: <defaults>
</compile_context>

<pallas_src>
import functools

import jax
import jax.numpy as jnp
from jax import lax
from jax.experimental import pallas as pl
from jax.experimental.pallas import tpu as pltpu

EPS = 1e-16  # matches LayerNorm(eps=1e-16); effectively a no-op in f32 (kept for fidelity)


def _round_up(n: int, m: int) -> int:
    return ((n + m - 1) // m) * m


def _sublayer_connection_kernel(*refs, dropout_p: float):
    if dropout_p > 0.0:
        x_ref, bits_ref, w_ref, p_ref, o_ref = refs
    else:
        x_ref, w_ref, p_ref, o_ref = refs
        bits_ref = None

    x = x_ref[...].astype(jnp.float32)                      # (bm, H)
    h = x.shape[-1]

    # ---- LayerNorm (module semantics: unbiased std, eps added to std) ----
    # Fused row reductions: one pass for sum and sum-of-squares.
    s = jnp.sum(x, axis=-1, keepdims=True)
    ss = jnp.sum(x * x, axis=-1, keepdims=True)
    mean = s * (1.0 / h)
    var_unbiased = (ss - h * mean * mean) * (1.0 / (h - 1))
    std = jnp.sqrt(jnp.maximum(var_unbiased, 0.0))          # guard cancellation
    inv = 1.0 / (std + EPS)                                 # one reciprocal per row

    params = p_ref[...]                                     # (3, H): gamma, beta, bias
    gamma = params[0:1, :]
    beta = params[1:2, :]
    bias = params[2:3, :]

    normed = (x - mean) * (gamma * inv) + beta

    # ---- sublayer: Linear(H, H) on the MXU (bf16 operands, f32 accumulate) ----
    y = jnp.dot(normed.astype(w_ref.dtype), w_ref[...],
                preferred_element_type=jnp.float32) + bias

    # ---- inverted dropout: integer-threshold compare on precomputed bits ----
    if dropout_p > 0.0:
        thr = min(int(round(dropout_p * (2 ** 32))), (2 ** 32) - 1)
        keep = bits_ref[...] >= jnp.uint32(thr)             # P(keep) = 1 - p
        y = jnp.where(keep, y * (1.0 / (1.0 - dropout_p)), 0.0)

    # ---- residual add ----
    o_ref[...] = (x + y).astype(o_ref.dtype)


def sublayer_connection(x, w, b, gamma, beta, *, dropout_p=0.0, key=None,
                        block_rows=512, matmul_dtype=jnp.bfloat16):
    """x: [batch, seq, hidden]; w: [hidden, hidden]; b/gamma/beta: [hidden]."""
    batch, seq, hidden = x.shape
    rows = batch * seq

    # Sublane granularity: 8 for 4-byte, 16 for 2-byte, 32 for 1-byte dtypes.
    sub = {4: 8, 2: 16, 1: 32}.get(x.dtype.itemsize, 8)
    # Cap the tile so the grid keeps >= 2 steps when possible (v7x megacore).
    cap = _round_up(pl.cdiv(rows, 2), sub)
    bm = _round_up(max(sub, min(int(block_rows), cap)), sub)
    padded_rows = _round_up(rows, bm)

    x2 = x.reshape(rows, hidden)
    if padded_rows != rows:
        x2 = jnp.pad(x2, ((0, padded_rows - rows), (0, 0)))

    w_c = w.astype(matmul_dtype)                              # resident weight block
    params = jnp.stack([gamma, beta, b]).astype(jnp.float32)  # (3, H) single block

    row_spec = pl.BlockSpec((bm, hidden), lambda i: (i, 0))

    inputs = [x2]
    in_specs = [row_spec]
    if dropout_p > 0.0:
        if key is None:
            key = jax.random.PRNGKey(0)
        bits = jax.random.bits(key, (padded_rows, hidden), dtype=jnp.uint32)
        inputs.append(bits)
        in_specs.append(row_spec)
    inputs += [w_c, params]
    in_specs += [
        pl.BlockSpec((hidden, hidden), lambda i: (0, 0)),
        pl.BlockSpec((3, hidden), lambda i: (0, 0)),
    ]

    kernel = functools.partial(_sublayer_connection_kernel,
                               dropout_p=float(dropout_p))

    out = pl.pallas_call(
        kernel,
        out_shape=jax.ShapeDtypeStruct((padded_rows, hidden), x.dtype),
        grid=(padded_rows // bm,),
        in_specs=in_specs,
        out_specs=row_spec,
        compiler_params=pltpu.CompilerParams(
            dimension_semantics=("parallel",)),
    )(*inputs)

    return out[:rows].reshape(batch, seq, hidden)


def _reference(x, w, b, gamma, beta):
    """Pure-JAX, full-f32 reference of the PyTorch module (eval mode)."""
    xf = x.astype(jnp.float32)
    mean = jnp.mean(xf, axis=-1, keepdims=True)
    diff = xf - mean
    var = jnp.sum(diff * diff, axis=-1, keepdims=True) / (xf.shape[-1] - 1)
    std = jnp.sqrt(var)
    normed = gamma * diff / (std + EPS) + beta
    y = jnp.dot(normed, w, precision=lax.Precision.HIGHEST) + b
    return xf + y


if __name__ == "__main__":
    batch, seq, hidden = 2, 8, 128

    key = jax.random.PRNGKey(0)
    kx, kw, kb, kd = jax.random.split(key, 4)

    x = jax.random.normal(kx, (batch, seq, hidden), dtype=jnp.float32)
    # Deterministic sublayer (Linear) parameters.
    w = jax.random.normal(kw, (hidden, hidden), dtype=jnp.float32) * 0.02
    b = jax.random.normal(kb, (hidden,), dtype=jnp.float32) * 0.02
    # LayerNorm affine params as in the module's __init__.
    gamma = jnp.ones((hidden,), dtype=jnp.float32)
    beta = jnp.zeros((hidden,), dtype=jnp.float32)

    ref = _reference(x, w, b, gamma, beta)

    # Eval-mode path with a full-precision matmul: must track the module closely.
    out_f32 = jax.block_until_ready(
        sublayer_connection(x, w, b, gamma, beta, dropout_p=0.0,
                            matmul_dtype=jnp.float32))
    assert jnp.allclose(out_f32, ref, atol=2e-3, rtol=2e-3), "f32 path mismatch"

    # Default fast path (bf16 MXU operands, f32 accumulation): looser tolerance.
    out_bf16 = jax.block_until_ready(
        sublayer_connection(x, w, b, gamma, beta, dropout_p=0.0))
    assert jnp.allclose(out_bf16, ref, atol=3e-2, rtol=3e-2), "bf16 path mismatch"

    # Training path: inverted dropout driven by precomputed random bits.
    p = 0.1
    out_drop = jax.block_until_ready(
        sublayer_connection(x, w, b, gamma, beta, dropout_p=p, key=kd))
    assert bool(jnp.all(jnp.isfinite(out_drop)))
    # Dropped elements leave out == x exactly; check the drop fraction is sane.
    drop_frac = float(jnp.mean((out_drop == x).astype(jnp.float32)))
    assert 0.03 <= drop_frac <= 0.25, f"unexpected drop fraction {drop_frac}"

    print("KERNEL_OK")
</pallas_src>

<mosaic_0001>
module attributes {stable_mosaic.version = 11 : i64} {
  func.func @_sublayer_connection_kernel(%arg0: i32, %arg1: memref<8x128xf32, #tpu.memory_space<vmem>>, %arg2: memref<128x128xf32, #tpu.memory_space<vmem>>, %arg3: memref<3x128xf32, #tpu.memory_space<vmem>>, %arg4: memref<8x128xf32, #tpu.memory_space<vmem>>) attributes {dimension_semantics = [#tpu.dimension_semantics<parallel>], iteration_bounds = array<i64: 2>, scalar_prefetch = 0 : i64, scratch_operands = 0 : i64, tpu.core_type = #tpu.core_type<tc>, window_params = [{transform_indices = @transform_0, window_bounds = array<i64: 8, 128>}, {pipeline_mode = #tpu.pipeline_mode<synchronous>, transform_indices = @transform_1, window_bounds = array<i64: 128, 128>}, {pipeline_mode = #tpu.pipeline_mode<synchronous>, transform_indices = @transform_2, window_bounds = array<i64: 3, 128>}, {transform_indices = @transform_3, window_bounds = array<i64: 8, 128>}]} {
    %c0 = arith.constant 0 : index
    %c0_0 = arith.constant 0 : index
    %0 = vector.load %arg1[%c0, %c0_0] : memref<8x128xf32, #tpu.memory_space<vmem>>, vector<8x128xf32>
    %cst = arith.constant dense<0.000000e+00> : vector<8xf32>
    %1 = vector.multi_reduction <add>, %0, %cst [1] : vector<8x128xf32> to vector<8xf32>
    %2 = vector.shape_cast %1 : vector<8xf32> to vector<8x1xf32>
    %3 = arith.mulf %0, %0 : vector<8x128xf32>
    %cst_1 = arith.constant dense<0.000000e+00> : vector<8xf32>
    %4 = vector.multi_reduction <add>, %3, %cst_1 [1] : vector<8x128xf32> to vector<8xf32>
    %5 = vector.shape_cast %4 : vector<8xf32> to vector<8x1xf32>
    %cst_2 = arith.constant 7.812500e-03 : f32
    %6 = vector.broadcast %cst_2 : f32 to vector<8x1xf32>
    %7 = arith.mulf %2, %6 : vector<8x1xf32>
    %cst_3 = arith.constant 1.280000e+02 : f32
    %8 = vector.broadcast %cst_3 : f32 to vector<8x1xf32>
    %9 = arith.mulf %8, %7 : vector<8x1xf32>
    %10 = arith.mulf %9, %7 : vector<8x1xf32>
    %11 = arith.subf %5, %10 : vector<8x1xf32>
    %cst_4 = arith.constant 0.00787401571 : f32
    %12 = vector.broadcast %cst_4 : f32 to vector<8x1xf32>
    %13 = arith.mulf %11, %12 : vector<8x1xf32>
    %cst_5 = arith.constant 0.000000e+00 : f32
    %14 = vector.broadcast %cst_5 : f32 to vector<8x1xf32>
    %15 = arith.maximumf %13, %14 : vector<8x1xf32>
    %16 = math.sqrt %15 : vector<8x1xf32>
    %cst_6 = arith.constant 1.000000e-16 : f32
    %17 = vector.broadcast %cst_6 : f32 to vector<8x1xf32>
    %18 = arith.addf %16, %17 : vector<8x1xf32>
    %cst_7 = arith.constant 1.000000e+00 : f32
    %19 = vector.broadcast %cst_7 : f32 to vector<8x1xf32>
    %20 = arith.divf %19, %18 : vector<8x1xf32>
    %c0_8 = arith.constant 0 : index
    %c0_9 = arith.constant 0 : index
    %21 = vector.load %arg3[%c0_8, %c0_9] : memref<3x128xf32, #tpu.memory_space<vmem>>, vector<3x128xf32>
    %22 = vector.extract_strided_slice %21 {offsets = [0, 0], sizes = [1, 128], strides = [1, 1]} : vector<3x128xf32> to vector<1x128xf32>
    %23 = vector.extract_strided_slice %21 {offsets = [1, 0], sizes = [1, 128], strides = [1, 1]} : vector<3x128xf32> to vector<1x128xf32>
    %24 = vector.extract_strided_slice %21 {offsets = [2, 0], sizes = [1, 128], strides = [1, 1]} : vector<3x128xf32> to vector<1x128xf32>
    %25 = vector.broadcast %7 : vector<8x1xf32> to vector<8x128xf32>
    %26 = arith.subf %0, %25 : vector<8x128xf32>
    %27 = vector.broadcast %22 : vector<1x128xf32> to vector<8x128xf32>
    %28 = vector.broadcast %20 : vector<8x1xf32> to vector<8x128xf32>
    %29 = arith.mulf %27, %28 : vector<8x128xf32>
    %30 = arith.mulf %26, %29 : vector<8x128xf32>
    %31 = vector.broadcast %23 : vector<1x128xf32> to vector<8x128xf32>
    %32 = arith.addf %30, %31 : vector<8x128xf32>
    %c0_10 = arith.constant 0 : index
    %c0_11 = arith.constant 0 : index
    %33 = vector.load %arg2[%c0_10, %c0_11] : memref<128x128xf32, #tpu.memory_space<vmem>>, vector<128x128xf32>
    %cst_12 = arith.constant dense<0.000000e+00> : vector<8x128xf32>
    %34 = tpu.matmul %32, %33, %cst_12 {dimension_numbers = #tpu.dot_dimension_numbers<[1], [0], [0], [1], [0, 0, 1, 1], [], []>} : vector<8x128xf32>, vector<128x128xf32>, vector<8x128xf32> -> vector<8x128xf32>
    %35 = vector.broadcast %24 : vector<1x128xf32> to vector<8x128xf32>
    %36 = arith.addf %34, %35 : vector<8x128xf32>
    %37 = arith.addf %0, %36 : vector<8x128xf32>
    %c0_13 = arith.constant 0 : index
    %c0_14 = arith.constant 0 : index
    %38 = vector.load %arg4[%c0_13, %c0_14] : memref<8x128xf32, #tpu.memory_space<vmem>>, vector<8x128xf32>
    tpu.vector_store %arg4[%c0_13, %c0_14], %37 {strides = array<i32>} : memref<8x128xf32, #tpu.memory_space<vmem>>, vector<8x128xf32>,
    return
  }
  func.func @transform_0(%arg0: i32) -> (i32, i32) {
    %c0_i32 = arith.constant 0 : i32
    %c0_i32_0 = arith.constant 0 : i32
    return %arg0, %c0_i32 : i32, i32
  }
  func.func @transform_1(%arg0: i32) -> (i32, i32) {
    %c0_i32 = arith.constant 0 : i32
    %c0_i32_0 = arith.constant 0 : i32
    %c0_i32_1 = arith.constant 0 : i32
    return %c0_i32, %c0_i32_0 : i32, i32
  }
  func.func @transform_2(%arg0: i32) -> (i32, i32) {
    %c0_i32 = arith.constant 0 : i32
    %c0_i32_0 = arith.constant 0 : i32
    %c0_i32_1 = arith.constant 0 : i32
    return %c0_i32, %c0_i32_0 : i32, i32
  }
  func.func @transform_3(%arg0: i32) -> (i32, i32) {
    %c0_i32 = arith.constant 0 : i32
    %c0_i32_0 = arith.constant 0 : i32
    return %arg0, %c0_i32 : i32, i32
  }
}

</mosaic_0001>

<llo_original>
// kernel: tpu_custom_call.1
$region0: #{tpu_custom_call.1}
  #allocation0 [shape = 'u32[]', space=smem, size = 0x4, offset = 0x4, fixed_abs, tag = 'smem constant byte address 0x4 - core index']
  #allocation1 [shape = 'u32[144,128]{1,0:T(1,128)}', space=vmem, size = 0x12000, scoped, tag = 'internal scratch']
  %s0 = inlined_call_operand.hbm [shape: f32[16,128], index: 0, kind: input, shape index: {}]
  %s1 = inlined_call_operand.hbm [shape: f32[128,128], index: 1, kind: input, shape index: {}]
  %s2 = inlined_call_operand.vmem [shape: f32[3,128], index: 2, kind: input, shape index: {}]
  %s3 = inlined_call_operand.hbm [shape: f32[16,128], index: 3, kind: output, shape index: {}]
  %s4 = sld [smem:[#allocation0]]
  $region53: #{tpu_custom_call.1} parent=0
    _
  %s6 = ssub.s32 1, %s4
  %s7 = scalar_select 0, %s6, %s4
  $region1: #{tpu_custom_call.1} parent=0
    #allocation2 [shape = 'u8[8192]{0}', space=vmem, size = 0x2000, scoped, tag = 'input window, operand 0']
    #allocation3 [shape = 's32[2]{0}', space=sflag, size = 0x8, scoped, tag = 'scoped memory for tpu_custom_call.1']
    #allocation4 [shape = 's32[2]{0}', space=sflag, size = 0x8, scoped, tag = 'scoped memory for tpu_custom_call.1']
    #allocation5 [shape = 'u8[65536]{0}', space=vmem, size = 0x10000, scoped, tag = 'input window, operand 1, single buffered']
    #allocation6 [shape = 's32[1]{0}', space=sflag, size = 0x4, scoped, tag = 'scoped memory for tpu_custom_call.1']
    #allocation7 [shape = 'u8[8192]{0}', space=vmem, size = 0x2000, scoped, tag = 'output window, operand 0']
    %8 = vsyncpa [#allocation3], 0
    %s9 = scalar_lea.sflag [#allocation3], 1
    %10 = vsyncpa %s9, 0
    %11 = vsyncpa [#allocation6], 0
    %12 = vsyncpa [#allocation4], 0
    %s13 = scalar_lea.sflag [#allocation4], 1
    %14 = vsyncpa %s13, 0
    loop: start=0, step=1, limit=4
    $region2: #{tpu_custom_call.1} parent=1 // loop_pre_header
      _
    $region3: #{tpu_custom_call.1} parent=1 // loop_header
      %s16 = sphi 0, %s20
      %p17 = scmp.ge.s32.totalorder %s16, 4
      %s26 = sphi 0, %s28
      %s29 = sphi 0, %s26
      %s30 = sphi 0, %s29
      %s46 = sphi 0, %s30
      %s50 = sphi 0, %s50
      %s52 = sphi 0, %s50
      %s53 = sphi 0, %s52
      %s67 = sphi 0, %s53
      %s71 = sphi 0, %s71
      %s73 = sphi 0, %s71
      %s74 = sphi 0, %s73
      %s88 = sphi 0, %s74
      %s94 = sphi 0, %s96
      %s97 = sphi 0, %s94
      %s98 = sphi 0, %s97
      %s114 = sphi 0, %s98
    $region4: #{tpu_custom_call.1} parent=1 // loop_header_branch
      %19 = sbr.rel (%p17) target = $region8
    $region5: #{tpu_custom_call.1} parent=1 // loop_body
      %s21 = ssub.s32 %s16, 1
      %s22 = ssub.s32 %s16, 2
      %s23 = sadd.s32 %s16, 1
      %s24 = ssub.s32 %s16, %s23
      %p25 = scmp.eq.s32.totalorder %s24, 0
      %s27 = sadd.s32 %s26, 1
      %s28 = scalar_select %p25, %s26, %s27
      %p31 = pneg %p25
      %p32 = scmp.eq.s32.totalorder %s16, 1
      %p33 = por %p31, %p32
      %p34 = scmp.ne.s32.totalorder %s26, %s29
      %p35 = scmp.eq.s32.totalorder %s16, 0
      %p36 = por %p34, %p35
      %p37 = scmp.ne.s32.totalorder %s26, %s29
      %p38 = scmp.eq.s32.totalorder %s21, 1
      %p39 = por %p37, %p38
      %p40 = scmp.ne.s32.totalorder %s29, %s30
      %p41 = scmp.eq.s32.totalorder %s21, 0
      %p42 = por %p40, %p41
      %p43 = scmp.ne.s32.totalorder %s29, %s30
      %p44 = scmp.eq.s32.totalorder %s22, 1
      %p45 = por %p43, %p44
      %p47 = scmp.ne.s32.totalorder %s30, %s46
      %p48 = scmp.eq.s32.totalorder %s22, 0
      %p49 = por %p47, %p48
      %s51 = sadd.s32 %s50, 1
      %p54 = scmp.eq.s32.totalorder %s16, 1
      %p55 = scmp.ne.s32.totalorder %s50, %s52
      %p56 = scmp.eq.s32.totalorder %s16, 0
      %p57 = por %p55, %p56
      %p58 = scmp.ne.s32.totalorder %s50, %s52
      %p59 = scmp.eq.s32.totalorder %s21, 1
      %p60 = por %p58, %p59
      %p61 = scmp.ne.s32.totalorder %s52, %s53
      %p62 = scmp.eq.s32.totalorder %s21, 0
      %p63 = por %p61, %p62
      %p64 = scmp.ne.s32.totalorder %s52, %s53
      %p65 = scmp.eq.s32.totalorder %s22, 1
      %p66 = por %p64, %p65
      %p68 = scmp.ne.s32.totalorder %s53, %s67
      %p69 = scmp.eq.s32.totalorder %s22, 0
      %p70 = por %p68, %p69
      %s72 = sadd.s32 %s71, 1
      %p75 = scmp.eq.s32.totalorder %s16, 1
      %p76 = scmp.ne.s32.totalorder %s71, %s73
      %p77 = scmp.eq.s32.totalorder %s16, 0
      %p78 = por %p76, %p77
      %p79 = scmp.ne.s32.totalorder %s71, %s73
      %p80 = scmp.eq.s32.totalorder %s21, 1
      %p81 = por %p79, %p80
      %p82 = scmp.ne.s32.totalorder %s73, %s74
      %p83 = scmp.eq.s32.totalorder %s21, 0
      %p84 = por %p82, %p83
      %p85 = scmp.ne.s32.totalorder %s73, %s74
      %p86 = scmp.eq.s32.totalorder %s22, 1
      %p87 = por %p85, %p86
      %p89 = scmp.ne.s32.totalorder %s74, %s88
      %p90 = scmp.eq.s32.totalorder %s22, 0
      %p91 = por %p89, %p90
      %s92 = ssub.s32 %s16, %s23
      %p93 = scmp.eq.s32.totalorder %s92, 0
      %s95 = sadd.s32 %s94, 1
      %s96 = scalar_select %p93, %s94, %s95
      %p99 = pneg %p93
      %p100 = scmp.eq.s32.totalorder %s16, 1
      %p101 = por %p99, %p100
      %p102 = scmp.ne.s32.totalorder %s94, %s97
      %p103 = scmp.eq.s32.totalorder %s16, 0
      %p104 = por %p102, %p103
      %p105 = scmp.ne.s32.totalorder %s94, %s97
      %p106 = scmp.eq.s32.totalorder %s21, 1
      %p107 = por %p105, %p106
      %p108 = scmp.ne.s32.totalorder %s97, %s98
      %p109 = scmp.eq.s32.totalorder %s21, 0
      %p110 = por %p108, %p109
      %p111 = scmp.ne.s32.totalorder %s97, %s98
      %p112 = scmp.eq.s32.totalorder %s22, 1
      %p113 = por %p111, %p112
      %p115 = scmp.ne.s32.totalorder %s98, %s114
      %p116 = scmp.eq.s32.totalorder %s22, 0
      %p117 = por %p115, %p116
      %p118 = scmp.le.s32.totalorder 1, %s16
      %p119 = scmp.lt.s32.totalorder %s16, 3
      %p120 = pnand %p118, %p119
      %p121 = pneg %p120
      // Predicated region
      $region9: #{tpu_custom_call.1} parent=5 // pred_check
        _
      $region10: #{tpu_custom_call.1} parent=5 // pred_check_branch
        %123 = sbr.rel (%p120) target = $region12
      $region11: #{tpu_custom_call.1} parent=5 // pred_region
        %s124 = ssub.s32 %s16, 1
        // Predicated region
        $region13: #{tpu_custom_call.1} parent=11 // pred_check
          %p125 = pneg %p63
        $region14: #{tpu_custom_call.1} parent=11 // pred_check_branch
          %127 = sbr.rel (%p125) target = $region16
        $region15: #{tpu_custom_call.1} parent=11 // pred_region
          %s129 = ssub.s32 2048, 2048
          %130 = vsyncadd [#allocation6], %s129
          %s131 = sshll.u32 [#allocation5], 4
          %s132 = int_to_ptr.vmem [resolvable:$true] %s131
          %137 = dma.hbm_to_vmem [thread:$0]  %s1, 2048, %s132, [#allocation6], 128, 128, 8
        $region16: #{tpu_custom_call.1} parent=11 // pred_fallthru
          _
        // Predicated region
        $region17: #{tpu_custom_call.1} parent=11 // pred_check
          %p138 = pneg %p84
        $region18: #{tpu_custom_call.1} parent=11 // pred_check_branch
          %140 = sbr.rel (%p138) target = $region20
        $region19: #{tpu_custom_call.1} parent=11 // pred_region
          _
        $region20: #{tpu_custom_call.1} parent=11 // pred_fallthru
          _
      $region12: #{tpu_custom_call.1} parent=5 // pred_fallthru
        _
      %p141 = scmp.lt.s32.totalorder %s16, 2
      // Predicated region
      $region21: #{tpu_custom_call.1} parent=5 // pred_check
        %p142 = pneg %p141
      $region22: #{tpu_custom_call.1} parent=5 // pred_check_branch
        %144 = sbr.rel (%p142) target = $region24
      $region23: #{tpu_custom_call.1} parent=5 // pred_region
        // Predicated region
        $region25: #{tpu_custom_call.1} parent=23 // pred_check
          %p145 = pneg %p36
        $region26: #{tpu_custom_call.1} parent=23 // pred_check_branch
          %147 = sbr.rel (%p145) target = $region28
        $region27: #{tpu_custom_call.1} parent=23 // pred_region
          %s148 = sand.u32 %s26, 1
          %s149 = scalar_lea.sflag [#allocation3], %s148
          %s150 = sand.u32 %s26, 1
          %s151 = smul.addr %s150, 8
          %s152 = scalar_lea.vmem [#allocation2], %s151
          %s154 = ssub.s32 128, 128
          %155 = vsyncadd %s149, %s154
          %s156 = smul.addr %s16, 128
          %s157 = scalar_lea.hbm %s0, %s156
          %s159 = sshll.u32 %s152, 4
          %s160 = int_to_ptr.vmem [resolvable:$true] %s159
          %162 = dma.hbm_to_vmem [thread:$0]  %s157, 128, %s160, %s149
        $region28: #{tpu_custom_call.1} parent=23 // pred_fallthru
          _
      $region24: #{tpu_custom_call.1} parent=5 // pred_fallthru
        _
      %p163 = scmp.le.s32.totalorder 1, %s16
      %p164 = scmp.lt.s32.totalorder %s16, 3
      %p165 = pnand %p163, %p164
      %p166 = pneg %p165
      // Predicated region
      $region29: #{tpu_custom_call.1} parent=5 // pred_check
        _
      $region30: #{tpu_custom_call.1} parent=5 // pred_check_branch
        %168 = sbr.rel (%p165) target = $region32
      $region31: #{tpu_custom_call.1} parent=5 // pred_region
        %s169 = ssub.s32 %s16, 1
        %s170 = sand.u32 %s29, 1
        %s171 = scalar_lea.sflag [#allocation3], %s170
        %s172 = sand.u32 %s29, 1
        %s173 = smul.addr %s172, 8
        %s174 = scalar_lea.vmem [#allocation2], %s173
        // Predicated region
        $region33: #{tpu_custom_call.1} parent=31 // pred_check
          %p175 = pneg %p42
        $region34: #{tpu_custom_call.1} parent=31 // pred_check_branch
          %177 = sbr.rel (%p175) target = $region36
        $region35: #{tpu_custom_call.1} parent=31 // pred_region
          %178 = dma.done %s171, 128
        $region36: #{tpu_custom_call.1} parent=31 // pred_fallthru
          _
        // Predicated region
        $region37: #{tpu_custom_call.1} parent=31 // pred_check
          %p179 = pneg %p63
        $region38: #{tpu_custom_call.1} parent=31 // pred_check_branch
          %181 = sbr.rel (%p179) target = $region40
        $region39: #{tpu_custom_call.1} parent=31 // pred_region
          %182 = dma.done [#allocation6], 2048
        $region40: #{tpu_custom_call.1} parent=31 // pred_fallthru
          _
        %s183 = sand.u32 %s29, 1
        %s184 = scalar_lea.sflag [#allocation3], %s183
        %s185 = sand.u32 %s29, 1
        %s186 = smul.addr %s185, 8
        %s187 = scalar_lea.vmem [#allocation2], %s186
        %p188 = pneg %p42
        %p189 = pneg %p39
        %p190 = pneg %p63
        %p191 = pneg %p60
        %p192 = pneg %p84
        %p193 = pneg %p81
        %p194 = pneg %p110
        %p195 = pneg %p107
        %s196 = sand.u32 %s97, 1
        %s197 = scalar_lea.sflag [#allocation4], %s196
        %s198 = sand.u32 %s97, 1
        %s199 = smul.addr %s198, 8
        %s200 = scalar_lea.vmem [#allocation7], %s199
        %v201 = vld [vmem:[%s174] sm:$0xff]
        %202 = vadd.xlane.f32.xlu0 %v201
        %v203 = vpop.xlane.xlu0 %202
        %v204 = vmul.f32 %v201, %v201
        %205 = vadd.xlane.f32.xlu0 %v204
        %v206 = vpop.xlane.xlu0 %205
        %v207 = vmul.f32 %v203, 0.0078125
        %v208 = vmul.f32 %v207, 128.0
        %v209 = vmul.f32 %v208, %v207
        %v210 = vsub.f32 %v206, %v209
        %v211 = vmul.f32 %v210, 0.007874016
        %v212 = vmax.f32 %v211, 0.0
        %v213 = vrsqrt.pop %v212
        %v214 = vmul.f32 %v212, %v213
        %vm215 = vcmp.eq.f32.partialorder %v212, inf
        %v216 = vsel %vm215, %v212, %v214
        %vm217 = vcmp.eq.f32.partialorder %v212, 0.0
        %v218 = vand.u32 %v212, 2147483648
        %v219 = vsel %vm217, %v218, %v216
        %v220 = vadd.f32 %v219, 1e-16
        %v221 = vrcp.pop %v220
        %v222 = vmul.f32 1.0, %v221
        %v223 = vld [vmem:[%s2] sm:$0x7]
        %v224 = vsub.f32 %v201, %v207
        %v225 = vlaneseq
        %v226 = vshrl.u32 %v225, 7
        %v227 = vsub.s32 0, %v226
        %v228 = vrot.slane %v223, %v227
        %v229 = vmul.f32 %v228, %v222
        %v230 = vmul.f32 %v224, %v229
        %v231 = vlaneseq
        %v232 = vshrl.u32 %v231, 7
        %v233 = vsub.s32 1, %v232
        %v234 = vrot.slane %v223, %v233
        %v235 = vadd.f32 %v230, %v234
        %v236 = vld [vmem:[#allocation5] sm:$0xff]
        %v237 = vld [vmem:[#allocation5 + $0x8] sm:$0xff]
        %v238 = vld [vmem:[#allocation5 + $0x10] sm:$0xff]
        %v239 = vld [vmem:[#allocation5 + $0x18] sm:$0xff]
        %v240 = vld [vmem:[#allocation5 + $0x20] sm:$0xff]
        %v241 = vld [vmem:[#allocation5 + $0x28] sm:$0xff]
        %v242 = vld [vmem:[#allocation5 + $0x30] sm:$0xff]
        %v243 = vld [vmem:[#allocation5 + $0x38] sm:$0xff]
        %v244 = vld [vmem:[#allocation5 + $0x40] sm:$0xff]
        %v245 = vld [vmem:[#allocation5 + $0x48] sm:$0xff]
        %v246 = vld [vmem:[#allocation5 + $0x50] sm:$0xff]
        %v247 = vld [vmem:[#allocation5 + $0x58] sm:$0xff]
        %v248 = vld [vmem:[#allocation5 + $0x60] sm:$0xff]
        %v249 = vld [vmem:[#allocation5 + $0x68] sm:$0xff]
        %v250 = vld [vmem:[#allocation5 + $0x70] sm:$0xff]
        %v251 = vld [vmem:[#allocation5 + $0x78] sm:$0xff]
        %v252 = vlaneseq
        %v253 = vshrl.u32 %v252, 7
        %v254 = vsub.s32 2, %v253
        %v255 = vrot.slane %v223, %v254
        %256 = vmatprep.subr.mxu0 0.0
        %257 = vmatpush1.msra.mxu0 %v236
        %258 = vmatprep.subr.mxu0 0.0
        %259 = vmatpush1.msra.mxu0 %v237
        %260 = vmatprep.subr.mxu0 0.0
        %261 = vmatpush1.msra.mxu0 %v238
        %262 = vmatprep.subr.mxu0 0.0
        %263 = vmatpush1.msra.mxu0 %v239
        %264 = vmatprep.subr.mxu0 0.0
        %265 = vmatpush1.msra.mxu0 %v240
        %266 = vmatprep.subr.mxu0 0.0
        %267 = vmatpush1.msra.mxu0 %v241
        %268 = vmatprep.subr.mxu0 0.0
        %269 = vmatpush1.msra.mxu0 %v242
        %270 = vmatprep.subr.mxu0 0.0
        %271 = vmatpush1.msra.mxu0 %v243
        %272 = vmatprep.subr.mxu0 0.0
        %273 = vmatpush1.msra.mxu0 %v244
        %274 = vmatprep.subr.mxu0 0.0
        %275 = vmatpush1.msra.mxu0 %v245
        %276 = vmatprep.subr.mxu0 0.0
        %277 = vmatpush1.msra.mxu0 %v246
        %278 = vmatprep.subr.mxu0 0.0
        %279 = vmatpush1.msra.mxu0 %v247
        %280 = vmatprep.subr.mxu0 0.0
        %281 = vmatpush1.msra.mxu0 %v248
        %282 = vmatprep.subr.mxu0 0.0
        %283 = vmatpush1.msra.mxu0 %v249
        %284 = vmatprep.subr.mxu0 0.0
        %285 = vmatpush1.msra.mxu0 %v250
        %286 = vmatprep.subr.mxu0 0.0
        %287 = vmatpush1.msra.mxu0 %v251
        %288 = vmatprep.subr.mxu0 0.0
        %289 = vmatpush1.msra.mxu0 0.0
        %290 = vmatprep.subr.mxu0 0.0
        %291 = vmatpush1.msra.mxu0 0.0
        %292 = vmatprep.subr.mxu0 0.0
        %293 = vmatpush1.msra.mxu0 0.0
        %294 = vmatprep.subr.mxu0 0.0
        %295 = vmatpush1.msra.mxu0 0.0
        %296 = vmatprep.subr.mxu0 0.0
        %297 = vmatpush1.msra.mxu0 0.0
        %298 = vmatprep.subr.mxu0 0.0
        %299 = vmatpush1.msra.mxu0 0.0
        %300 = vmatprep.subr.mxu0 0.0
        %301 = vmatpush1.msra.mxu0 0.0
        %302 = vmatprep.subr.mxu0 0.0
        %303 = vmatpush1.msra.mxu0 0.0
        %304 = vmatprep.subr.mxu0 0.0
        %305 = vmatpush1.msra.mxu0 0.0
        %306 = vmatprep.subr.mxu0 0.0
        %307 = vmatpush1.msra.mxu0 0.0
        %308 = vmatprep.subr.mxu0 0.0
        %309 = vmatpush1.msra.mxu0 0.0
        %310 = vmatprep.subr.mxu0 0.0
        %311 = vmatpush1.msra.mxu0 0.0
        %312 = vmatprep.subr.mxu0 0.0
        %313 = vmatpush1.msra.mxu0 0.0
        %314 = vmatprep.subr.mxu0 0.0
        %315 = vmatpush1.msra.mxu0 0.0
        %316 = vmatprep.subr.mxu0 0.0
        %317 = vmatpush1.msra.mxu0 0.0
        %318 = vmatprep.subr.mxu0 0.0
        %319 = vmatpush1.msra.mxu0 0.0
        %320 = vmatprep.mubr.f32.mxu0 0.0
        %321 = vmatmul.mubr.f32.gmra.mrb[0].mxu0 %v235
        %v322 = vpop.f32.mrb[0].mxu0
        %v323 = vadd.f32 %v255, %v322
        %v324 = vpop.f32.mrb[0].mxu0
        %325 = vdwg.mxu0
        %v326 = vadd.f32 %v201, %v323
        %327 = vst [vmem:[%s200] sm:$0xff] %v326
        %s328 = sand.u32 %s97, 1
        %s329 = scalar_lea.sflag [#allocation4], %s328
        %s330 = sand.u32 %s97, 1
        %s331 = smul.addr %s330, 8
        %s332 = scalar_lea.vmem [#allocation7], %s331
        // Predicated region
        $region41: #{tpu_custom_call.1} parent=31 // pred_check
          %p333 = pneg %p107
        $region42: #{tpu_custom_call.1} parent=31 // pred_check_branch
          %335 = sbr.rel (%p333) target = $region44
        $region43: #{tpu_custom_call.1} parent=31 // pred_region
          %s337 = ssub.s32 128, 128
          %338 = vsyncadd %s329, %s337
          %s339 = smul.addr %s21, 128
          %s340 = scalar_lea.hbm %s3, %s339
          %s342 = sshll.u32 %s332, 4
          %s343 = int_to_ptr.vmem [resolvable:$true] %s342
          %345 = dma.vmem_to_hbm [thread:$0]  %s343, 128, %s340, %s329
        $region44: #{tpu_custom_call.1} parent=31 // pred_fallthru
          _
      $region32: #{tpu_custom_call.1} parent=5 // pred_fallthru
        _
      %p346 = scmp.le.s32.totalorder 2, %s16
      // Predicated region
      $region45: #{tpu_custom_call.1} parent=5 // pred_check
        %p347 = pneg %p346
      $region46: #{tpu_custom_call.1} parent=5 // pred_check_branch
        %349 = sbr.rel (%p347) target = $region48
      $region47: #{tpu_custom_call.1} parent=5 // pred_region
        %s350 = ssub.s32 %s16, 2
        // Predicated region
        $region49: #{tpu_custom_call.1} parent=47 // pred_check
          %p351 = pneg %p113
        $region50: #{tpu_custom_call.1} parent=47 // pred_check_branch
          %353 = sbr.rel (%p351) target = $region52
        $region51: #{tpu_custom_call.1} parent=47 // pred_region
          %s354 = sand.u32 %s98, 1
          %s355 = scalar_lea.sflag [#allocation4], %s354
          %s356 = sand.u32 %s98, 1
          %s357 = smul.addr %s356, 8
          %s358 = scalar_lea.vmem [#allocation7], %s357
          %359 = dma.done %s355, 128
        $region52: #{tpu_custom_call.1} parent=47 // pred_fallthru
          _
      $region48: #{tpu_custom_call.1} parent=5 // pred_fallthru
        _
    $region6: #{tpu_custom_call.1} parent=1 // loop_footer
      %s20 = sadd.s32 1, %s16
    $region7: #{tpu_custom_call.1} parent=1 // loop_footer_branch
      %15 = sbr.rel target = $region3
    $region8: #{tpu_custom_call.1} parent=1 // loop_exit
      _
    %360 = vsyncpa [#allocation3], 1
    %s361 = scalar_lea.sflag [#allocation3], 1
    %362 = vsyncpa %s361, 1
    %363 = vsyncpa [#allocation6], 1
    %364 = vsyncpa [#allocation4], 1
    %s365 = scalar_lea.sflag [#allocation4], 1
    %366 = vsyncpa %s365, 1

</llo_original>
